<compile_context>
chip_gen: v5e
topology: v5e:2x2
jax: 0.10.0
libtpu: 0.0.40
codegen_flags: <defaults>
</compile_context>

<pallas_src>
import functools

import jax
import jax.numpy as jnp
from jax import lax
from jax.experimental import pallas as pl
from jax.experimental.pallas import tpu as pltpu

EPS = 1e-12
LANE = 128


def _round_up(a, b):
    return (a + b - 1) // b * b


def _sublayer_kernel(x_ref, a_ref, b_ref, w_ref, wb_ref, o_ref, *, h, hp):
    """One (tm, hp) row-tile: LayerNorm -> Linear (bf16 MXU) -> residual."""
    x = x_ref[...].astype(jnp.float32)            # (tm, hp); padded lanes are 0

    # --- LayerNorm (torch semantics: unbiased std, eps added to std) ---
    mean = jnp.sum(x, axis=-1, keepdims=True) * (1.0 / h)
    centered = x - mean
    if hp != h:
        # Mask out padded lanes so they don't pollute the variance.
        lane = lax.broadcasted_iota(jnp.int32, (1, hp), 1)
        centered = jnp.where(lane < h, centered, 0.0)
    var = jnp.sum(centered * centered, axis=-1, keepdims=True) * (1.0 / (h - 1))
    inv = pl.reciprocal(jnp.sqrt(var) + EPS, approx=False)   # EUP slot
    normed = centered * (a_ref[...] * inv) + b_ref[...]

    # --- sublayer: Linear(H -> H), bf16 inputs, f32 accumulation on the MXU ---
    sub = jnp.dot(normed.astype(jnp.bfloat16), w_ref[...],
                  preferred_element_type=jnp.float32)
    sub = sub + wb_ref[...]

    # --- residual connection ---
    o_ref[...] = (x + sub).astype(o_ref.dtype)


def sublayer_connection(x, a_2, b_2, w, w_b, *, tm=256):
    """out = x + (LayerNorm(x) @ w + w_b).  x: [..., H]; w: [H, H]; vectors: [H]."""
    orig_shape = x.shape
    H = orig_shape[-1]
    assert H > 1, "unbiased std needs H > 1"
    rows = 1
    for d in orig_shape[:-1]:
        rows *= d

    # Lane-dense layout: pad hidden dim to a multiple of 128.
    Hp = _round_up(H, LANE)

    # Row tile: multiple of the sublane tile for the dtype, clamped so tiny
    # inputs don't over-pad.
    sub_tile = 16 if x.dtype == jnp.bfloat16 else 8
    tm = max(sub_tile, _round_up(min(tm, _round_up(rows, sub_tile)), sub_tile))
    rows_p = _round_up(rows, tm)

    x2 = x.reshape(rows, H)
    if rows_p != rows or Hp != H:
        x2 = jnp.pad(x2, ((0, rows_p - rows), (0, Hp - H)))

    def pad_vec(v):
        v = v.reshape(1, H).astype(jnp.float32)
        if Hp != H:
            v = jnp.pad(v, ((0, 0), (0, Hp - H)))
        return v

    a2 = pad_vec(a_2)
    b2 = pad_vec(b_2)
    wb = pad_vec(w_b)

    w_bf = w.astype(jnp.bfloat16)
    if Hp != H:
        w_bf = jnp.pad(w_bf, ((0, Hp - H), (0, Hp - H)))

    # VMEM budget: double-buffered x/out tiles + single resident params.
    tile_bytes = tm * Hp * 4
    needed = 2 * 2 * tile_bytes + Hp * Hp * 2 + 4 * Hp * 4
    vmem_limit = max(32 << 20, min(int(needed) + (16 << 20), 64 << 20))

    kernel = functools.partial(_sublayer_kernel, h=H, hp=Hp)
    # Whole-array VMEM placement: no blocking, no per-step DMA / double buffer.
    # TODO(synk): for very large H, column-tile w as (Hp, tn) on a second
    # "parallel" grid axis instead of keeping the full weight resident.
    vmem_resident = pl.BlockSpec(memory_space=pltpu.MemorySpace.VMEM)

    out = pl.pallas_call(
        kernel,
        out_shape=jax.ShapeDtypeStruct((rows_p, Hp), x.dtype),
        grid_spec=pltpu.PrefetchScalarGridSpec(
            num_scalar_prefetch=0,
            grid=(rows_p // tm,),
            in_specs=[
                pl.BlockSpec((tm, Hp), lambda i: (i, 0)),  # x rows (pipelined)
                vmem_resident,                             # a_2
                vmem_resident,                             # b_2
                vmem_resident,                             # w (bf16)
                vmem_resident,                             # w_b
            ],
            out_specs=pl.BlockSpec((tm, Hp), lambda i: (i, 0)),
        ),
        compiler_params=pltpu.CompilerParams(
            dimension_semantics=("parallel",),   # shards rows across TCs on v7x
            vmem_limit_bytes=vmem_limit,
        ),
    )(x2, a2, b2, w_bf, wb)

    out = out[:rows, :H]
    return out.reshape(orig_shape)


def _reference(x, a_2, b_2, w, w_b):
    """Pure-JAX reference mirroring the kernel (bf16 matmul, f32 accumulate)."""
    xf = x.astype(jnp.float32)
    mean = jnp.mean(xf, axis=-1, keepdims=True)
    centered = xf - mean
    var = jnp.sum(centered * centered, axis=-1, keepdims=True) / (xf.shape[-1] - 1)
    std = jnp.sqrt(var)
    normed = a_2 * centered / (std + EPS) + b_2
    sub = jnp.dot(normed.astype(jnp.bfloat16), w.astype(jnp.bfloat16),
                  preferred_element_type=jnp.float32) + w_b
    return xf + sub


if __name__ == "__main__":
    B, S, H = 2, 8, 32
    key = jax.random.PRNGKey(0)
    kx, kw, kb = jax.random.split(key, 3)

    x = jax.random.normal(kx, (B, S, H), dtype=jnp.float32)

    # LayerNorm params exactly as in __init__: ones / zeros.
    a_2 = jnp.ones((H,), dtype=jnp.float32)
    b_2 = jnp.zeros((H,), dtype=jnp.float32)

    # Deterministic synthetic sublayer (Linear H -> H).
    w = jax.random.normal(kw, (H, H), dtype=jnp.float32) * 0.05
    w_b = jax.random.normal(kb, (H,), dtype=jnp.float32) * 0.01

    out = sublayer_connection(x, a_2, b_2, w, w_b)
    out = jax.block_until_ready(out)

    ref = _reference(x, a_2, b_2, w, w_b)
    assert out.shape == (B, S, H)
    assert jnp.allclose(out, ref, atol=1e-3, rtol=1e-3), "mismatch vs reference"

    print("KERNEL_OK")
</pallas_src>

<mosaic_0001>
module attributes {stable_mosaic.version = 11 : i64} {
  func.func @_sublayer_kernel(%arg0: i32, %arg1: memref<16x128xf32, #tpu.memory_space<vmem>>, %arg2: memref<1x128xf32, #tpu.memory_space<vmem>>, %arg3: memref<1x128xf32, #tpu.memory_space<vmem>>, %arg4: memref<128x128xbf16, #tpu.memory_space<vmem>>, %arg5: memref<1x128xf32, #tpu.memory_space<vmem>>, %arg6: memref<16x128xf32, #tpu.memory_space<vmem>>) attributes {dimension_semantics = [#tpu.dimension_semantics<parallel>], iteration_bounds = array<i64: 1>, scalar_prefetch = 0 : i64, scratch_operands = 0 : i64, tpu.core_type = #tpu.core_type<tc>, window_params = [{transform_indices = @transform_0, window_bounds = array<i64: 16, 128>}, {pipeline_mode = #tpu.pipeline_mode<synchronous>, transform_indices = @transform_1, window_bounds = array<i64: 1, 128>}, {pipeline_mode = #tpu.pipeline_mode<synchronous>, transform_indices = @transform_2, window_bounds = array<i64: 1, 128>}, {pipeline_mode = #tpu.pipeline_mode<synchronous>, transform_indices = @transform_3, window_bounds = array<i64: 128, 128>}, {pipeline_mode = #tpu.pipeline_mode<synchronous>, transform_indices = @transform_4, window_bounds = array<i64: 1, 128>}, {transform_indices = @transform_5, window_bounds = array<i64: 16, 128>}]} {
    %c0 = arith.constant 0 : index
    %c0_0 = arith.constant 0 : index
    %0 = vector.load %arg1[%c0, %c0_0] : memref<16x128xf32, #tpu.memory_space<vmem>>, vector<16x128xf32>
    %cst = arith.constant dense<0.000000e+00> : vector<16xf32>
    %1 = vector.multi_reduction <add>, %0, %cst [1] : vector<16x128xf32> to vector<16xf32>
    %2 = vector.shape_cast %1 : vector<16xf32> to vector<16x1xf32>
    %cst_1 = arith.constant 3.125000e-02 : f32
    %3 = vector.broadcast %cst_1 : f32 to vector<16x1xf32>
    %4 = arith.mulf %2, %3 : vector<16x1xf32>
    %5 = vector.broadcast %4 : vector<16x1xf32> to vector<16x128xf32>
    %6 = arith.subf %0, %5 : vector<16x128xf32>
    %7 = tpu.iota {dimensions = array<i32: 1>} : vector<1x128xi32>
    %c32_i32 = arith.constant 32 : i32
    %8 = vector.broadcast %c32_i32 : i32 to vector<1x128xi32>
    %9 = arith.cmpi slt, %7, %8 : vector<1x128xi32>
    %cst_2 = arith.constant 0.000000e+00 : f32
    %10 = vector.shape_cast %9 : vector<1x128xi1> to vector<1x128xi1>
    %11 = vector.broadcast %10 : vector<1x128xi1> to vector<16x128xi1>
    %12 = vector.broadcast %cst_2 : f32 to vector<16x128xf32>
    %13 = arith.select %11, %6, %12 : vector<16x128xi1>, vector<16x128xf32>
    %14 = arith.mulf %13, %13 : vector<16x128xf32>
    %cst_3 = arith.constant dense<0.000000e+00> : vector<16xf32>
    %15 = vector.multi_reduction <add>, %14, %cst_3 [1] : vector<16x128xf32> to vector<16xf32>
    %16 = vector.shape_cast %15 : vector<16xf32> to vector<16x1xf32>
    %cst_4 = arith.constant 0.0322580636 : f32
    %17 = vector.broadcast %cst_4 : f32 to vector<16x1xf32>
    %18 = arith.mulf %16, %17 : vector<16x1xf32>
    %19 = math.sqrt %18 : vector<16x1xf32>
    %cst_5 = arith.constant 9.99999996E-13 : f32
    %20 = vector.broadcast %cst_5 : f32 to vector<16x1xf32>
    %21 = arith.addf %19, %20 : vector<16x1xf32>
    %22 = tpu.reciprocal %21 : vector<16x1xf32> -> vector<16x1xf32>
    %c0_6 = arith.constant 0 : index
    %c0_7 = arith.constant 0 : index
    %23 = vector.load %arg2[%c0_6, %c0_7] : memref<1x128xf32, #tpu.memory_space<vmem>>, vector<1x128xf32>
    %24 = vector.broadcast %23 : vector<1x128xf32> to vector<16x128xf32>
    %25 = vector.broadcast %22 : vector<16x1xf32> to vector<16x128xf32>
    %26 = arith.mulf %24, %25 : vector<16x128xf32>
    %27 = arith.mulf %13, %26 : vector<16x128xf32>
    %c0_8 = arith.constant 0 : index
    %c0_9 = arith.constant 0 : index
    %28 = vector.load %arg3[%c0_8, %c0_9] : memref<1x128xf32, #tpu.memory_space<vmem>>, vector<1x128xf32>
    %29 = vector.broadcast %28 : vector<1x128xf32> to vector<16x128xf32>
    %30 = arith.addf %27, %29 : vector<16x128xf32>
    %31 = arith.truncf %30 : vector<16x128xf32> to vector<16x128xbf16>
    %c0_10 = arith.constant 0 : index
    %c0_11 = arith.constant 0 : index
    %32 = vector.load %arg4[%c0_10, %c0_11] : memref<128x128xbf16, #tpu.memory_space<vmem>>, vector<128x128xbf16>
    %cst_12 = arith.constant dense<0.000000e+00> : vector<16x128xf32>
    %33 = tpu.matmul %31, %32, %cst_12 {dimension_numbers = #tpu.dot_dimension_numbers<[1], [0], [0], [1], [0, 0, 1, 1], [], []>} : vector<16x128xbf16>, vector<128x128xbf16>, vector<16x128xf32> -> vector<16x128xf32>
    %c0_13 = arith.constant 0 : index
    %c0_14 = arith.constant 0 : index
    %34 = vector.load %arg5[%c0_13, %c0_14] : memref<1x128xf32, #tpu.memory_space<vmem>>, vector<1x128xf32>
    %35 = vector.broadcast %34 : vector<1x128xf32> to vector<16x128xf32>
    %36 = arith.addf %33, %35 : vector<16x128xf32>
    %37 = arith.addf %0, %36 : vector<16x128xf32>
    %c0_15 = arith.constant 0 : index
    %c0_16 = arith.constant 0 : index
    %38 = vector.load %arg6[%c0_15, %c0_16] : memref<16x128xf32, #tpu.memory_space<vmem>>, vector<16x128xf32>
    tpu.vector_store %arg6[%c0_15, %c0_16], %37 {strides = array<i32>} : memref<16x128xf32, #tpu.memory_space<vmem>>, vector<16x128xf32>,
    return
  }
  func.func @transform_0(%arg0: i32) -> (i32, i32) {
    %c0_i32 = arith.constant 0 : i32
    %c0_i32_0 = arith.constant 0 : i32
    return %arg0, %c0_i32 : i32, i32
  }
  func.func @transform_1(%arg0: i32) -> (i32, i32) {
    %c0_i32 = arith.constant 0 : i32
    %c0_i32_0 = arith.constant 0 : i32
    %c0_i32_1 = arith.constant 0 : i32
    return %c0_i32, %c0_i32_0 : i32, i32
  }
  func.func @transform_2(%arg0: i32) -> (i32, i32) {
    %c0_i32 = arith.constant 0 : i32
    %c0_i32_0 = arith.constant 0 : i32
    %c0_i32_1 = arith.constant 0 : i32
    return %c0_i32, %c0_i32_0 : i32, i32
  }
  func.func @transform_3(%arg0: i32) -> (i32, i32) {
    %c0_i32 = arith.constant 0 : i32
    %c0_i32_0 = arith.constant 0 : i32
    %c0_i32_1 = arith.constant 0 : i32
    return %c0_i32, %c0_i32_0 : i32, i32
  }
  func.func @transform_4(%arg0: i32) -> (i32, i32) {
    %c0_i32 = arith.constant 0 : i32
    %c0_i32_0 = arith.constant 0 : i32
    %c0_i32_1 = arith.constant 0 : i32
    return %c0_i32, %c0_i32_0 : i32, i32
  }
  func.func @transform_5(%arg0: i32) -> (i32, i32) {
    %c0_i32 = arith.constant 0 : i32
    %c0_i32_0 = arith.constant 0 : i32
    return %arg0, %c0_i32 : i32, i32
  }
}

</mosaic_0001>

<llo_original>
// kernel: tpu_custom_call.1
$region0: #{tpu_custom_call.1}
  #allocation0 [shape = 'u32[]', space=smem, size = 0x4, offset = 0x4, fixed_abs, tag = 'smem constant byte address 0x4 - core index']
  #allocation1 [shape = 'u32[72,128]{1,0:T(1,128)}', space=vmem, size = 0x9000, scoped, tag = 'internal scratch']
  %s0 = inlined_call_operand.hbm [shape: f32[16,128], index: 0, kind: input, shape index: {}]
  %s1 = inlined_call_operand.hbm [shape: f32[1,128], index: 1, kind: input, shape index: {}]
  %s2 = inlined_call_operand.vmem [shape: f32[1,128], index: 2, kind: input, shape index: {}]
  %s3 = inlined_call_operand.hbm [shape: bf16[128,128], index: 3, kind: input, shape index: {}]
  %s4 = inlined_call_operand.vmem [shape: f32[1,128], index: 4, kind: input, shape index: {}]
  %s5 = inlined_call_operand.hbm [shape: f32[16,128], index: 5, kind: output, shape index: {}]
  %s6 = sld [smem:[#allocation0]]
  $region42: #{tpu_custom_call.1} parent=0
    _
  %s8 = ssub.s32 1, %s6
  %s9 = scalar_select 0, %s8, %s6
  $region1: #{tpu_custom_call.1} parent=0
    #allocation2 [shape = 'u8[8192]{0}', space=vmem, size = 0x2000, scoped, tag = 'input window, operand 0, single buffered']
    #allocation3 [shape = 's32[1]{0}', space=sflag, size = 0x4, scoped, tag = 'scoped memory for tpu_custom_call.1']
    #allocation4 [shape = 's32[1]{0}', space=sflag, size = 0x4, scoped, tag = 'scoped memory for tpu_custom_call.1']
    #allocation5 [shape = 'u8[512]{0}', space=vmem, size = 0x400, scoped, tag = 'input window, operand 1, single buffered']
    #allocation6 [shape = 's32[1]{0}', space=sflag, size = 0x4, scoped, tag = 'scoped memory for tpu_custom_call.1']
    #allocation7 [shape = 'u8[32768]{0}', space=vmem, size = 0x8000, scoped, tag = 'input window, operand 3, single buffered']
    #allocation8 [shape = 'u8[8192]{0}', space=vmem, size = 0x2000, scoped, tag = 'output window, operand 0, single buffered']
    %10 = vsyncpa [#allocation3], 0
    %11 = vsyncpa [#allocation6], 0
    %12 = vsyncpa [#allocation4], 0
    // Predicated region
    $region2: #{tpu_custom_call.1} parent=1 // pred_check
      _
    $region3: #{tpu_custom_call.1} parent=1 // pred_check_branch
      %14 = sbr.rel (0) target = $region5
    $region4: #{tpu_custom_call.1} parent=1 // pred_region
      %16 = vsyncadd [#allocation3], 0
      %s17 = sshll.u32 %s0, 4
      %s18 = int_to_ptr.hbm [resolvable:$true] %s17
      %s19 = sshll.u32 [#allocation2], 4
      %s20 = int_to_ptr.vmem [resolvable:$true] %s19
      %25 = dma.hbm_to_vmem [thread:$0]  %s18, 256, %s20, [#allocation3], 128, 128, 8
    $region5: #{tpu_custom_call.1} parent=1 // pred_fallthru
      _
    // Predicated region
    $region6: #{tpu_custom_call.1} parent=1 // pred_check
      _
    $region7: #{tpu_custom_call.1} parent=1 // pred_check_branch
      %27 = sbr.rel (0) target = $region9
    $region8: #{tpu_custom_call.1} parent=1 // pred_region
      %29 = vsyncadd [#allocation6], 0
      %s31 = sshll.u32 %s1, 4
      %s32 = int_to_ptr.hbm [resolvable:$true] %s31
      %s33 = sshll.u32 [#allocation5], 4
      %s34 = int_to_ptr.vmem [resolvable:$true] %s33
      %36 = dma.hbm_to_vmem [thread:$0]  %s32, 16, %s34, [#allocation6]
    $region9: #{tpu_custom_call.1} parent=1 // pred_fallthru
      _
    // Predicated region
    $region10: #{tpu_custom_call.1} parent=1 // pred_check
      _
    $region11: #{tpu_custom_call.1} parent=1 // pred_check_branch
      %38 = sbr.rel (0) target = $region13
    $region12: #{tpu_custom_call.1} parent=1 // pred_region
      _
    $region13: #{tpu_custom_call.1} parent=1 // pred_fallthru
      _
    // Predicated region
    $region14: #{tpu_custom_call.1} parent=1 // pred_check
      _
    $region15: #{tpu_custom_call.1} parent=1 // pred_check_branch
      %40 = sbr.rel (0) target = $region17
    $region16: #{tpu_custom_call.1} parent=1 // pred_region
      %42 = vsyncadd [#allocation6], 0
      %s43 = sshll.u32 %s3, 4
      %s44 = int_to_ptr.hbm [resolvable:$true] %s43
      %s45 = sshll.u32 [#allocation7], 4
      %s46 = int_to_ptr.vmem [resolvable:$true] %s45
      %51 = dma.hbm_to_vmem [thread:$0]  %s44, 1024, %s46, [#allocation6], 64, 64, 4
    $region17: #{tpu_custom_call.1} parent=1 // pred_fallthru
      _
    // Predicated region
    $region18: #{tpu_custom_call.1} parent=1 // pred_check
      _
    $region19: #{tpu_custom_call.1} parent=1 // pred_check_branch
      %53 = sbr.rel (0) target = $region21
    $region20: #{tpu_custom_call.1} parent=1 // pred_region
      _
    $region21: #{tpu_custom_call.1} parent=1 // pred_fallthru
      _
    // Predicated region
    $region22: #{tpu_custom_call.1} parent=1 // pred_check
      _
    $region23: #{tpu_custom_call.1} parent=1 // pred_check_branch
      %55 = sbr.rel (0) target = $region25
    $region24: #{tpu_custom_call.1} parent=1 // pred_region
      %57 = dma.done [#allocation3], 256
    $region25: #{tpu_custom_call.1} parent=1 // pred_fallthru
      _
    // Predicated region
    $region26: #{tpu_custom_call.1} parent=1 // pred_check
      _
    $region27: #{tpu_custom_call.1} parent=1 // pred_check_branch
      %59 = sbr.rel (0) target = $region29
    $region28: #{tpu_custom_call.1} parent=1 // pred_region
      %61 = dma.done [#allocation6], 16
    $region29: #{tpu_custom_call.1} parent=1 // pred_fallthru
      _
    // Predicated region
    $region30: #{tpu_custom_call.1} parent=1 // pred_check
      _
    $region31: #{tpu_custom_call.1} parent=1 // pred_check_branch
      %63 = sbr.rel (0) target = $region33
    $region32: #{tpu_custom_call.1} parent=1 // pred_region
      %65 = dma.done [#allocation6], 1024
    $region33: #{tpu_custom_call.1} parent=1 // pred_fallthru
      _
    %v66 = vld [vmem:[#allocation2] sm:$0xff]
    %v67 = vld [vmem:[#allocation2 + $0x8] sm:$0xff]
    %68 = vadd.xlane.f32.xlu0 %v66
    %v69 = vpop.xlane.xlu0 %68
    %70 = vadd.xlane.f32.xlu0 %v67
    %v71 = vpop.xlane.xlu0 %70
    %v72 = vmul.f32 %v69, 0.03125
    %v73 = vmul.f32 %v71, 0.03125
    %v74 = vsub.f32 %v66, %v72
    %v75 = vsub.f32 %v67, %v73
    %v76 = vlaneseq
    %v77 = vand.u32 %v76, 127
    %vm78 = vcmp.lt.s32.totalorder %v77, 32
    %v79 = vsel %vm78, 1, 0
    %vm80 = vcmp.eq.s32.totalorder %v79, 1
    %v81 = vsel %vm80, %v74, 0.0
    %v82 = vsel %vm80, %v75, 0.0
    %v83 = vmul.f32 %v81, %v81
    %v84 = vmul.f32 %v82, %v82
    %85 = vadd.xlane.f32.xlu0 %v83
    %v86 = vpop.xlane.xlu0 %85
    %87 = vadd.xlane.f32.xlu0 %v84
    %v88 = vpop.xlane.xlu0 %87
    %v89 = vmul.f32 %v86, 0.032258064
    %v90 = vmul.f32 %v88, 0.032258064
    %v91 = vrsqrt.pop %v89
    %v92 = vmul.f32 %v91, %v89
    %v93 = vmul.f32 %v92, %v91
    %v94 = vmul.f32 0.5, %v93
    %v95 = vsub.f32 1.5, %v94
    %v96 = vmul.f32 %v91, %v95
    %v97 = vmul.f32 %v89, %v96
    %vm98 = vcmp.eq.f32.partialorder %v89, inf
    %v99 = vsel %vm98, %v89, %v97
    %vm100 = vcmp.eq.f32.partialorder %v89, 0.0
    %v101 = vand.u32 %v89, 2147483648
    %v102 = vsel %vm100, %v101, %v99
    %v103 = vrsqrt.pop %v90
    %v104 = vmul.f32 %v103, %v90
    %v105 = vmul.f32 %v104, %v103
    %v106 = vmul.f32 0.5, %v105
    %v107 = vsub.f32 1.5, %v106
    %v108 = vmul.f32 %v103, %v107
    %v109 = vmul.f32 %v90, %v108
    %vm110 = vcmp.eq.f32.partialorder %v90, inf
    %v111 = vsel %vm110, %v90, %v109
    %vm112 = vcmp.eq.f32.partialorder %v90, 0.0
    %v113 = vand.u32 %v90, 2147483648
    %v114 = vsel %vm112, %v113, %v111
    %v115 = vadd.f32 %v102, 1e-12
    %v116 = vadd.f32 %v114, 1e-12
    %v117 = vrcp.pop %v115
    %v118 = vmul.f32 %v115, %v117
    %v119 = vsub.f32 1.0, %v118
    %v120 = vmul.f32 %v117, %v119
    %v121 = vadd.f32 %v117, %v120
    %vm122 = vweird.f32 %v115
    %vm123 = vweird.f32 %v117
    %vm124 = vmor %vm122, %vm123
    %v125 = vsel %vm124, %v117, %v121
    %v126 = vand.u32 2147483647, %v115
    %vm127 = vcmp.eq.f32.partialorder %v126, 8.507059e+37
    %v128 = vand.u32 %v115, 2147483648
    %v129 = vor.u32 1.1754944e-38, %v128
    %v130 = vsel %vm127, %v129, %v125
    %v131 = vrcp.pop %v116
    %v132 = vmul.f32 %v116, %v131
    %v133 = vsub.f32 1.0, %v132
    %v134 = vmul.f32 %v131, %v133
    %v135 = vadd.f32 %v131, %v134
    %vm136 = vweird.f32 %v116
    %vm137 = vweird.f32 %v131
    %vm138 = vmor %vm136, %vm137
    %v139 = vsel %vm138, %v131, %v135
    %v140 = vand.u32 2147483647, %v116
    %vm141 = vcmp.eq.f32.partialorder %v140, 8.507059e+37
    %v142 = vand.u32 %v116, 2147483648
    %v143 = vor.u32 1.1754944e-38, %v142
    %v144 = vsel %vm141, %v143, %v139
    %v145 = vld [vmem:[#allocation5] sm:$0x1]
    %v147 = vperm.slane %v145, 0
    %v149 = vmul.f32 %v147, %v130
    %v150 = vmul.f32 %v147, %v144
    %v151 = vmul.f32 %v81, %v149
    %v152 = vmul.f32 %v82, %v150
    %v153 = vld [vmem:[%s2] sm:$0x1]
    %v155 = vperm.slane %v153, 0
    %v157 = vadd.f32 %v151, %v155
    %v158 = vadd.f32 %v152, %v155
    %v159 = vpack.c.bf16 %v158, %v157
    %v160 = vld [vmem:[#allocation7] sm:$0xf]
    %v161 = vld [vmem:[#allocation7 + $0x4] sm:$0xf]
    %v162 = vld [vmem:[#allocation7 + $0x8] sm:$0xf]
    %v163 = vld [vmem:[#allocation7 + $0xc] sm:$0xf]
    %v164 = vld [vmem:[#allocation7 + $0x10] sm:$0xf]
    %v165 = vld [vmem:[#allocation7 + $0x14] sm:$0xf]
    %v166 = vld [vmem:[#allocation7 + $0x18] sm:$0xf]
    %v167 = vld [vmem:[#allocation7 + $0x1c] sm:$0xf]
    %v168 = vld [vmem:[#allocation7 + $0x20] sm:$0xf]
    %v169 = vld [vmem:[#allocation7 + $0x24] sm:$0xf]
    %v170 = vld [vmem:[#allocation7 + $0x28] sm:$0xf]
    %v171 = vld [vmem:[#allocation7 + $0x2c] sm:$0xf]
    %v172 = vld [vmem:[#allocation7 + $0x30] sm:$0xf]
    %v173 = vld [vmem:[#allocation7 + $0x34] sm:$0xf]
    %v174 = vld [vmem:[#allocation7 + $0x38] sm:$0xf]
    %v175 = vld [vmem:[#allocation7 + $0x3c] sm:$0xf]
    %v176 = vld [vmem:[%s4] sm:$0x1]
    %v178 = vperm.slane %v176, 0
    %v196 = vunpack.c.l.b16 %v160
    %v197 = vunpack.c.l.b16 %v161
    %v198 = vunpack.c.l.b16 %v162
    %v199 = vunpack.c.l.b16 %v163
    %v200 = vunpack.c.l.b16 %v164
    %v201 = vunpack.c.l.b16 %v165
    %v202 = vunpack.c.l.b16 %v166
    %v203 = vunpack.c.l.b16 %v167
    %v204 = vunpack.c.l.b16 %v168
    %v205 = vunpack.c.l.b16 %v169
    %v206 = vunpack.c.l.b16 %v170
    %v207 = vunpack.c.l.b16 %v171
    %v208 = vunpack.c.l.b16 %v172
    %v209 = vunpack.c.l.b16 %v173
    %v210 = vunpack.c.l.b16 %v174
    %v211 = vunpack.c.l.b16 %v175
    %v212 = vpack.c.b16 %v197, %v196
    %v213 = vpack.c.b16 %v199, %v198
    %v214 = vpack.c.b16 %v201, %v200
    %v215 = vpack.c.b16 %v203, %v202
    %v216 = vpack.c.b16 %v205, %v204
    %v217 = vpack.c.b16 %v207, %v206
    %v218 = vpack.c.b16 %v209, %v208
    %v219 = vpack.c.b16 %v211, %v210
    %228 = vmatpush.bf16.msra.mxu0 %v219
    %229 = vmatpush.bf16.msra.mxu0 %v218
    %230 = vmatpush.bf16.msra.mxu0 %v217
    %231 = vmatpush.bf16.msra.mxu0 %v216
    %232 = vmatpush.bf16.msra.mxu0 %v215
    %233 = vmatpush.bf16.msra.mxu0 %v214
    %234 = vmatpush.bf16.msra.mxu0 %v213
    %235 = vmatpush.bf16.msra.mxu0 %v212
    %236 = vmatmul.bf16.gmra.mxu0 %v159
    %v237 = vpop.f32.mrf.mxu0
    %v238 = vadd.f32 %v178, %v237
    %v239 = vpop.f32.mrf.mxu0
    %v240 = vadd.f32 %v178, %v239
    %241 = vdwg.mxu0
    %v242 = vadd.f32 %v66, %v238
    %v243 = vadd.f32 %v67, %v240
    %244 = vst [vmem:[#allocation8] sm:$0xff] %v242
    %245 = vst [vmem:[#allocation8 + $0x8] sm:$0xff] %v243
    // Predicated region
    $region34: #{tpu_custom_call.1} parent=1 // pred_check
      _
    $region35: #{tpu_custom_call.1} parent=1 // pred_check_branch
      %247 = sbr.rel (0) target = $region37
    $region36: #{tpu_custom_call.1} parent=1 // pred_region
      %249 = vsyncadd [#allocation4], 0
      %s250 = sshll.u32 [#allocation8], 4
      %s251 = int_to_ptr.vmem [resolvable:$true] %s250
      %s252 = sshll.u32 %s5, 4
      %s253 = int_to_ptr.hbm [resolvable:$true] %s252
      %258 = dma.vmem_to_hbm [thread:$0]  %s251, 256, %s253, [#allocation4], 128, 128, 8
    $region37: #{tpu_custom_call.1} parent=1 // pred_fallthru
      _
    // Predicated region
    $region38: #{tpu_custom_call.1} parent=1 // pred_check
      _
    $region39: #{tpu_custom_call.1} parent=1 // pred_check_branch
      %260 = sbr.rel (0) target = $region41
    $region40: #{tpu_custom_call.1} parent=1 // pred_region
      %262 = dma.done [#allocation4], 256
    $region41: #{tpu_custom_call.1} parent=1 // pred_fallthru
      _
    %263 = vsyncpa [#allocation3], 1
    %264 = vsyncpa [#allocation6], 1
    %265 = vsyncpa [#allocation4], 1

</llo_original>
